<compile_context>
chip_gen: v5e
topology: v5e:2x2
jax: 0.10.0
libtpu: 0.0.40
codegen_flags: <defaults>
</compile_context>

<pallas_src>
import jax
import jax.numpy as jnp
from jax.experimental import pallas as pl
from jax.experimental.pallas import tpu as pltpu

INPUT_DIM = 150
N_HIDDEN = 20
N_GAUSSIANS = 5
HEAD_WIDTH = 3 * N_GAUSSIANS + 1   # weight | sigma | mu | pad  -> 16 lanes


def mdn_kernel(x_ref, wh_ref, bh_ref, w_heads_ref, b_heads_ref, out_ref):
    # Hidden layer: single-pass bf16 MXU matmul, f32 accumulate, +bias, tanh.
    x_bf16 = x_ref[...].astype(jnp.bfloat16)                       # (TB, 150)
    z_h = jnp.tanh(
        jnp.dot(x_bf16, wh_ref[...], preferred_element_type=jnp.float32)
        + bh_ref[...]
    )                                                               # (TB, 20) f32

    # Fused heads: one (20, 16) f32 matmul for [weight | sigma | mu | pad].
    heads = (jnp.dot(z_h, w_heads_ref[...], preferred_element_type=jnp.float32)
             + b_heads_ref[...])                                    # (TB, 16)

    # (1, 16) column masks, broadcast in the selects below.
    col = jax.lax.broadcasted_iota(jnp.int32, (1, HEAD_WIDTH), 1)
    is_w = col < N_GAUSSIANS
    is_s = (col >= N_GAUSSIANS) & (col < 2 * N_GAUSSIANS)
    is_m = (col >= 2 * N_GAUSSIANS) & (col < 3 * N_GAUSSIANS)

    # Stable softmax max over the 5 weight lanes only.
    w_logits = jnp.where(is_w, heads, -jnp.inf)
    w_max = jnp.max(w_logits, axis=-1, keepdims=True)               # (TB, 1)

    # Single exp pass serving both the softmax numerator and sigma:
    #   weight lanes -> exp(heads - max); sigma lanes -> exp(heads);
    #   mu / pad lanes -> exp(0) = 1 (unused).
    e_arg = jnp.where(is_w, heads - w_max, jnp.where(is_s, heads, 0.0))
    e = jnp.exp(e_arg)                                              # (TB, 16)

    w_den = jnp.sum(jnp.where(is_w, e, 0.0), axis=-1, keepdims=True)
    inv_den = pl.reciprocal(w_den, approx=True)

    # Pack: softmax cols, exp cols, identity cols, pad col -> 0.
    out_ref[...] = jnp.where(
        is_w, e * inv_den,
        jnp.where(is_s, e, jnp.where(is_m, heads, 0.0)))


def _round_up(n, m):
    return ((n + m - 1) // m) * m


def mdn_forward(x, params, *, block_b=None):
    """x: (B, INPUT_DIM) f32.  Returns (weight, sigma, mu), each (B, N_GAUSSIANS) f32."""
    wh, bh, ww, bw, ws, bs, wm, bm = params
    B = x.shape[0]

    # Hidden weights in bf16 (tiny one-off wrapper cast; the dominant x stream
    # is cast in-kernel instead).  Heads stay f32.
    wh_bf16 = wh.astype(jnp.bfloat16)

    # Pack the three head projections into one (20, 16) weight / (1, 16) bias.
    w_heads = jnp.concatenate(
        [ww, ws, wm, jnp.zeros((N_HIDDEN, 1), jnp.float32)], axis=1)
    b_heads = jnp.concatenate(
        [bw, bs, bm, jnp.zeros((1, 1), jnp.float32)], axis=1)

    # Batch tile: sublane-aligned, >=2 grid steps when possible (v7x megacore),
    # capped at 4096 rows (fits v5e's 16 MiB default scoped VMEM).
    if block_b is None:
        block_b = min(4096, _round_up(pl.cdiv(B, 2), 8))
    block_b = max(8, _round_up(block_b, 8))
    block_b = min(block_b, _round_up(B, 8))

    grid = (pl.cdiv(B, block_b),)   # ragged last block allowed; no jnp.pad copy

    compiler_kwargs = dict(dimension_semantics=("parallel",))
    if block_b > 4096:
        # Size scoped VMEM to the double-buffered lane-padded x / out tiles
        # plus headroom (matters on v5e's 16 MiB default).
        needed = 2 * block_b * 256 * 4 + 2 * block_b * 128 * 4 + (4 << 20)
        compiler_kwargs["vmem_limit_bytes"] = int(needed)

    packed = pl.pallas_call(
        mdn_kernel,
        out_shape=jax.ShapeDtypeStruct((B, HEAD_WIDTH), jnp.float32),
        grid=grid,
        in_specs=[
            pl.BlockSpec((block_b, INPUT_DIM), lambda i: (i, 0)),    # streamed x
            pl.BlockSpec((INPUT_DIM, N_HIDDEN), lambda i: (0, 0)),   # resident (bf16)
            pl.BlockSpec((1, N_HIDDEN), lambda i: (0, 0)),           # resident
            pl.BlockSpec((N_HIDDEN, HEAD_WIDTH), lambda i: (0, 0)),  # resident
            pl.BlockSpec((1, HEAD_WIDTH), lambda i: (0, 0)),         # resident
        ],
        out_specs=pl.BlockSpec((block_b, HEAD_WIDTH), lambda i: (i, 0)),
        compiler_params=pltpu.CompilerParams(**compiler_kwargs),
    )(x, wh_bf16, bh, w_heads, b_heads)

    weight = packed[:, 0:N_GAUSSIANS]
    sigma = packed[:, N_GAUSSIANS:2 * N_GAUSSIANS]
    mu = packed[:, 2 * N_GAUSSIANS:3 * N_GAUSSIANS]
    return weight, sigma, mu


def init_params(key):
    """Deterministic init mimicking PyTorch nn.Linear default U(-1/sqrt(fan_in), ...).
    Weights stored as (in_features, out_features); biases as (1, out_features)."""
    ks = jax.random.split(key, 8)

    def linear(kw, kb, fan_in, fan_out):
        bound = 1.0 / jnp.sqrt(float(fan_in))
        w = jax.random.uniform(kw, (fan_in, fan_out), jnp.float32, -bound, bound)
        b = jax.random.uniform(kb, (1, fan_out), jnp.float32, -bound, bound)
        return w, b

    wh, bh = linear(ks[0], ks[1], INPUT_DIM, N_HIDDEN)
    ww, bw = linear(ks[2], ks[3], N_HIDDEN, N_GAUSSIANS)
    ws, bs = linear(ks[4], ks[5], N_HIDDEN, N_GAUSSIANS)
    wm, bm = linear(ks[6], ks[7], N_HIDDEN, N_GAUSSIANS)
    return wh, bh, ww, bw, ws, bs, wm, bm


def mdn_reference(x, params):
    """Pure-JAX f32 reference for correctness check."""
    wh, bh, ww, bw, ws, bs, wm, bm = params
    z_h = jnp.tanh(x @ wh + bh)
    weight = jax.nn.softmax(z_h @ ww + bw, axis=-1)
    sigma = jnp.exp(z_h @ ws + bs)
    mu = z_h @ wm + bm
    return weight, sigma, mu


if __name__ == "__main__":
    key = jax.random.PRNGKey(0)
    k_x, k_p = jax.random.split(key)

    B = 40                              # not a multiple of the default tile
    x = jax.random.normal(k_x, (B, INPUT_DIM), jnp.float32)
    params = init_params(k_p)

    # Default block_b -> 24 rows, 2 grid steps, ragged last block: exercises
    # the batch pipeline, the megacore-friendly >=2-step grid, and the
    # no-pad ragged-tail path.
    weight, sigma, mu = mdn_forward(x, params)
    jax.block_until_ready((weight, sigma, mu))

    w_ref, s_ref, m_ref = mdn_reference(x, params)
    assert weight.shape == sigma.shape == mu.shape == (B, N_GAUSSIANS)
    # weight goes through the approximate EUP reciprocal; sigma/mu inherit the
    # bf16 first-matmul rounding -> tolerances loosened accordingly.
    assert jnp.allclose(weight, w_ref, atol=2e-2, rtol=2e-2)
    assert jnp.allclose(sigma, s_ref, atol=3e-2, rtol=3e-2)
    assert jnp.allclose(mu, m_ref, atol=3e-2, rtol=3e-2)
    assert jnp.allclose(jnp.sum(weight, axis=-1), 1.0, atol=2e-2)

    print("KERNEL_OK")
</pallas_src>

<mosaic_0001>
module attributes {stable_mosaic.version = 11 : i64} {
  func.func @mdn_kernel(%arg0: i32, %arg1: memref<24x150xf32, #tpu.memory_space<vmem>>, %arg2: memref<150x20xbf16, #tpu.memory_space<vmem>>, %arg3: memref<1x20xf32, #tpu.memory_space<vmem>>, %arg4: memref<20x16xf32, #tpu.memory_space<vmem>>, %arg5: memref<1x16xf32, #tpu.memory_space<vmem>>, %arg6: memref<24x16xf32, #tpu.memory_space<vmem>>) attributes {dimension_semantics = [#tpu.dimension_semantics<parallel>], iteration_bounds = array<i64: 2>, scalar_prefetch = 0 : i64, scratch_operands = 0 : i64, tpu.core_type = #tpu.core_type<tc>, window_params = [{transform_indices = @transform_0, window_bounds = array<i64: 24, 150>}, {pipeline_mode = #tpu.pipeline_mode<synchronous>, transform_indices = @transform_1, window_bounds = array<i64: 150, 20>}, {pipeline_mode = #tpu.pipeline_mode<synchronous>, transform_indices = @transform_2, window_bounds = array<i64: 1, 20>}, {pipeline_mode = #tpu.pipeline_mode<synchronous>, transform_indices = @transform_3, window_bounds = array<i64: 20, 16>}, {pipeline_mode = #tpu.pipeline_mode<synchronous>, transform_indices = @transform_4, window_bounds = array<i64: 1, 16>}, {transform_indices = @transform_5, window_bounds = array<i64: 24, 16>}]} {
    %c0 = arith.constant 0 : index
    %c0_0 = arith.constant 0 : index
    %0 = vector.load %arg1[%c0, %c0_0] : memref<24x150xf32, #tpu.memory_space<vmem>>, vector<24x150xf32>
    %1 = arith.truncf %0 : vector<24x150xf32> to vector<24x150xbf16>
    %c0_1 = arith.constant 0 : index
    %c0_2 = arith.constant 0 : index
    %2 = vector.load %arg2[%c0_1, %c0_2] : memref<150x20xbf16, #tpu.memory_space<vmem>>, vector<150x20xbf16>
    %cst = arith.constant dense<0.000000e+00> : vector<24x20xf32>
    %3 = tpu.matmul %1, %2, %cst {dimension_numbers = #tpu.dot_dimension_numbers<[1], [0], [0], [1], [0, 0, 1, 1], [], []>} : vector<24x150xbf16>, vector<150x20xbf16>, vector<24x20xf32> -> vector<24x20xf32>
    %c0_3 = arith.constant 0 : index
    %c0_4 = arith.constant 0 : index
    %4 = vector.load %arg3[%c0_3, %c0_4] : memref<1x20xf32, #tpu.memory_space<vmem>>, vector<1x20xf32>
    %5 = vector.broadcast %4 : vector<1x20xf32> to vector<24x20xf32>
    %6 = arith.addf %3, %5 : vector<24x20xf32>
    %7 = math.tanh %6 : vector<24x20xf32>
    %c0_5 = arith.constant 0 : index
    %c0_6 = arith.constant 0 : index
    %8 = vector.load %arg4[%c0_5, %c0_6] : memref<20x16xf32, #tpu.memory_space<vmem>>, vector<20x16xf32>
    %cst_7 = arith.constant dense<0.000000e+00> : vector<24x16xf32>
    %9 = tpu.matmul %7, %8, %cst_7 {dimension_numbers = #tpu.dot_dimension_numbers<[1], [0], [0], [1], [0, 0, 1, 1], [], []>} : vector<24x20xf32>, vector<20x16xf32>, vector<24x16xf32> -> vector<24x16xf32>
    %c0_8 = arith.constant 0 : index
    %c0_9 = arith.constant 0 : index
    %10 = vector.load %arg5[%c0_8, %c0_9] : memref<1x16xf32, #tpu.memory_space<vmem>>, vector<1x16xf32>
    %11 = vector.broadcast %10 : vector<1x16xf32> to vector<24x16xf32>
    %12 = arith.addf %9, %11 : vector<24x16xf32>
    %13 = tpu.iota {dimensions = array<i32: 1>} : vector<1x16xi32>
    %c5_i32 = arith.constant 5 : i32
    %14 = vector.broadcast %c5_i32 : i32 to vector<1x16xi32>
    %15 = arith.cmpi slt, %13, %14 : vector<1x16xi32>
    %c5_i32_10 = arith.constant 5 : i32
    %16 = vector.broadcast %c5_i32_10 : i32 to vector<1x16xi32>
    %17 = arith.cmpi sge, %13, %16 : vector<1x16xi32>
    %c10_i32 = arith.constant 10 : i32
    %18 = vector.broadcast %c10_i32 : i32 to vector<1x16xi32>
    %19 = arith.cmpi slt, %13, %18 : vector<1x16xi32>
    %20 = arith.andi %17, %19 : vector<1x16xi1>
    %c10_i32_11 = arith.constant 10 : i32
    %21 = vector.broadcast %c10_i32_11 : i32 to vector<1x16xi32>
    %22 = arith.cmpi sge, %13, %21 : vector<1x16xi32>
    %c15_i32 = arith.constant 15 : i32
    %23 = vector.broadcast %c15_i32 : i32 to vector<1x16xi32>
    %24 = arith.cmpi slt, %13, %23 : vector<1x16xi32>
    %25 = arith.andi %22, %24 : vector<1x16xi1>
    %cst_12 = arith.constant 0xFF800000 : f32
    %26 = vector.shape_cast %15 : vector<1x16xi1> to vector<1x16xi1>
    %27 = vector.broadcast %26 : vector<1x16xi1> to vector<24x16xi1>
    %28 = vector.broadcast %cst_12 : f32 to vector<24x16xf32>
    %29 = arith.select %27, %12, %28 : vector<24x16xi1>, vector<24x16xf32>
    %cst_13 = arith.constant dense<0xFF800000> : vector<24xf32>
    %30 = vector.multi_reduction <maximumf>, %29, %cst_13 [1] : vector<24x16xf32> to vector<24xf32>
    %31 = vector.shape_cast %30 : vector<24xf32> to vector<24x1xf32>
    %32 = vector.broadcast %31 : vector<24x1xf32> to vector<24x16xf32>
    %33 = arith.subf %12, %32 : vector<24x16xf32>
    %cst_14 = arith.constant 0.000000e+00 : f32
    %34 = vector.shape_cast %20 : vector<1x16xi1> to vector<1x16xi1>
    %35 = vector.broadcast %34 : vector<1x16xi1> to vector<24x16xi1>
    %36 = vector.broadcast %cst_14 : f32 to vector<24x16xf32>
    %37 = arith.select %35, %12, %36 : vector<24x16xi1>, vector<24x16xf32>
    %38 = vector.shape_cast %15 : vector<1x16xi1> to vector<1x16xi1>
    %39 = vector.broadcast %38 : vector<1x16xi1> to vector<24x16xi1>
    %40 = arith.select %39, %33, %37 : vector<24x16xi1>, vector<24x16xf32>
    %41 = math.exp %40 : vector<24x16xf32>
    %cst_15 = arith.constant 0.000000e+00 : f32
    %42 = vector.shape_cast %15 : vector<1x16xi1> to vector<1x16xi1>
    %43 = vector.broadcast %42 : vector<1x16xi1> to vector<24x16xi1>
    %44 = vector.broadcast %cst_15 : f32 to vector<24x16xf32>
    %45 = arith.select %43, %41, %44 : vector<24x16xi1>, vector<24x16xf32>
    %cst_16 = arith.constant dense<0.000000e+00> : vector<24xf32>
    %46 = vector.multi_reduction <add>, %45, %cst_16 [1] : vector<24x16xf32> to vector<24xf32>
    %47 = vector.shape_cast %46 : vector<24xf32> to vector<24x1xf32>
    %48 = tpu.reciprocal %47 {approx = true} : vector<24x1xf32> -> vector<24x1xf32>
    %49 = vector.broadcast %48 : vector<24x1xf32> to vector<24x16xf32>
    %50 = arith.mulf %41, %49 : vector<24x16xf32>
    %cst_17 = arith.constant 0.000000e+00 : f32
    %51 = vector.shape_cast %25 : vector<1x16xi1> to vector<1x16xi1>
    %52 = vector.broadcast %51 : vector<1x16xi1> to vector<24x16xi1>
    %53 = vector.broadcast %cst_17 : f32 to vector<24x16xf32>
    %54 = arith.select %52, %12, %53 : vector<24x16xi1>, vector<24x16xf32>
    %55 = vector.shape_cast %20 : vector<1x16xi1> to vector<1x16xi1>
    %56 = vector.broadcast %55 : vector<1x16xi1> to vector<24x16xi1>
    %57 = arith.select %56, %41, %54 : vector<24x16xi1>, vector<24x16xf32>
    %58 = vector.shape_cast %15 : vector<1x16xi1> to vector<1x16xi1>
    %59 = vector.broadcast %58 : vector<1x16xi1> to vector<24x16xi1>
    %60 = arith.select %59, %50, %57 : vector<24x16xi1>, vector<24x16xf32>
    %c0_18 = arith.constant 0 : index
    %c0_19 = arith.constant 0 : index
    %61 = vector.load %arg6[%c0_18, %c0_19] : memref<24x16xf32, #tpu.memory_space<vmem>>, vector<24x16xf32>
    tpu.vector_store %arg6[%c0_18, %c0_19], %60 {strides = array<i32>} : memref<24x16xf32, #tpu.memory_space<vmem>>, vector<24x16xf32>,
    return
  }
  func.func @transform_0(%arg0: i32) -> (i32, i32) {
    %c0_i32 = arith.constant 0 : i32
    %c0_i32_0 = arith.constant 0 : i32
    return %arg0, %c0_i32 : i32, i32
  }
  func.func @transform_1(%arg0: i32) -> (i32, i32) {
    %c0_i32 = arith.constant 0 : i32
    %c0_i32_0 = arith.constant 0 : i32
    %c0_i32_1 = arith.constant 0 : i32
    return %c0_i32, %c0_i32_0 : i32, i32
  }
  func.func @transform_2(%arg0: i32) -> (i32, i32) {
    %c0_i32 = arith.constant 0 : i32
    %c0_i32_0 = arith.constant 0 : i32
    %c0_i32_1 = arith.constant 0 : i32
    return %c0_i32, %c0_i32_0 : i32, i32
  }
  func.func @transform_3(%arg0: i32) -> (i32, i32) {
    %c0_i32 = arith.constant 0 : i32
    %c0_i32_0 = arith.constant 0 : i32
    %c0_i32_1 = arith.constant 0 : i32
    return %c0_i32, %c0_i32_0 : i32, i32
  }
  func.func @transform_4(%arg0: i32) -> (i32, i32) {
    %c0_i32 = arith.constant 0 : i32
    %c0_i32_0 = arith.constant 0 : i32
    %c0_i32_1 = arith.constant 0 : i32
    return %c0_i32, %c0_i32_0 : i32, i32
  }
  func.func @transform_5(%arg0: i32) -> (i32, i32) {
    %c0_i32 = arith.constant 0 : i32
    %c0_i32_0 = arith.constant 0 : i32
    return %arg0, %c0_i32 : i32, i32
  }
}

</mosaic_0001>

<llo_original>
// kernel: tpu_custom_call.1
$region0: #{tpu_custom_call.1}
  #allocation0 [shape = 'u32[]', space=smem, size = 0x4, offset = 0x4, fixed_abs, tag = 'smem constant byte address 0x4 - core index']
  #allocation1 [shape = 'u32[72,128]{1,0:T(1,128)}', space=vmem, size = 0x9000, scoped, tag = 'internal scratch']
  %s0 = inlined_call_operand.vmem [shape: f32[40,150], index: 0, kind: input, shape index: {}]
  %s1 = inlined_call_operand.vmem [shape: bf16[150,20], index: 1, kind: input, shape index: {}]
  %s2 = inlined_call_operand.vmem [shape: f32[1,20], index: 2, kind: input, shape index: {}]
  %s3 = inlined_call_operand.vmem [shape: f32[20,16], index: 3, kind: input, shape index: {}]
  %s4 = inlined_call_operand.vmem [shape: f32[1,16], index: 4, kind: input, shape index: {}]
  %s5 = inlined_call_operand.vmem [shape: f32[40,16], index: 5, kind: output, shape index: {}]
  %s6 = sld [smem:[#allocation0]]
  $region101: #{tpu_custom_call.1} parent=0
    _
  %s8 = ssub.s32 1, %s6
  %s9 = scalar_select 0, %s8, %s6
  $region1: #{tpu_custom_call.1} parent=0
    #allocation2 [shape = 'u8[24576]{0}', space=vmem, size = 0x6000, scoped, tag = 'output window, operand 0']
    loop: start=0, step=1, limit=4
    $region2: #{tpu_custom_call.1} parent=1 // loop_pre_header
      _
    $region3: #{tpu_custom_call.1} parent=1 // loop_header
      %s11 = sphi 0, %s15
      %p12 = scmp.ge.s32.totalorder %s11, 4
      %s21 = sphi 0, %s23
      %s24 = sphi 0, %s21
      %s25 = sphi 0, %s24
      %s41 = sphi 0, %s25
      %s45 = sphi 0, %s45
      %s47 = sphi 0, %s45
      %s48 = sphi 0, %s47
      %s62 = sphi 0, %s48
      %s66 = sphi 0, %s66
      %s68 = sphi 0, %s66
      %s69 = sphi 0, %s68
      %s83 = sphi 0, %s69
      %s87 = sphi 0, %s87
      %s89 = sphi 0, %s87
      %s90 = sphi 0, %s89
      %s104 = sphi 0, %s90
      %s108 = sphi 0, %s108
      %s110 = sphi 0, %s108
      %s111 = sphi 0, %s110
      %s125 = sphi 0, %s111
      %s131 = sphi 0, %s133
      %s134 = sphi 0, %s131
      %s135 = sphi 0, %s134
      %s151 = sphi 0, %s135
    $region4: #{tpu_custom_call.1} parent=1 // loop_header_branch
      %14 = sbr.rel (%p12) target = $region8
    $region5: #{tpu_custom_call.1} parent=1 // loop_body
      %s16 = ssub.s32 %s11, 1
      %s17 = ssub.s32 %s11, 2
      %s18 = sadd.s32 %s11, 1
      %s19 = ssub.s32 %s11, %s18
      %p20 = scmp.eq.s32.totalorder %s19, 0
      %s22 = sadd.s32 %s21, 1
      %s23 = scalar_select %p20, %s21, %s22
      %p26 = pneg %p20
      %p27 = scmp.eq.s32.totalorder %s11, 1
      %p28 = por %p26, %p27
      %p29 = scmp.ne.s32.totalorder %s21, %s24
      %p30 = scmp.eq.s32.totalorder %s11, 0
      %p31 = por %p29, %p30
      %p32 = scmp.ne.s32.totalorder %s21, %s24
      %p33 = scmp.eq.s32.totalorder %s16, 1
      %p34 = por %p32, %p33
      %p35 = scmp.ne.s32.totalorder %s24, %s25
      %p36 = scmp.eq.s32.totalorder %s16, 0
      %p37 = por %p35, %p36
      %p38 = scmp.ne.s32.totalorder %s24, %s25
      %p39 = scmp.eq.s32.totalorder %s17, 1
      %p40 = por %p38, %p39
      %p42 = scmp.ne.s32.totalorder %s25, %s41
      %p43 = scmp.eq.s32.totalorder %s17, 0
      %p44 = por %p42, %p43
      %s46 = sadd.s32 %s45, 1
      %p49 = scmp.eq.s32.totalorder %s11, 1
      %p50 = scmp.ne.s32.totalorder %s45, %s47
      %p51 = scmp.eq.s32.totalorder %s11, 0
      %p52 = por %p50, %p51
      %p53 = scmp.ne.s32.totalorder %s45, %s47
      %p54 = scmp.eq.s32.totalorder %s16, 1
      %p55 = por %p53, %p54
      %p56 = scmp.ne.s32.totalorder %s47, %s48
      %p57 = scmp.eq.s32.totalorder %s16, 0
      %p58 = por %p56, %p57
      %p59 = scmp.ne.s32.totalorder %s47, %s48
      %p60 = scmp.eq.s32.totalorder %s17, 1
      %p61 = por %p59, %p60
      %p63 = scmp.ne.s32.totalorder %s48, %s62
      %p64 = scmp.eq.s32.totalorder %s17, 0
      %p65 = por %p63, %p64
      %s67 = sadd.s32 %s66, 1
      %p70 = scmp.eq.s32.totalorder %s11, 1
      %p71 = scmp.ne.s32.totalorder %s66, %s68
      %p72 = scmp.eq.s32.totalorder %s11, 0
      %p73 = por %p71, %p72
      %p74 = scmp.ne.s32.totalorder %s66, %s68
      %p75 = scmp.eq.s32.totalorder %s16, 1
      %p76 = por %p74, %p75
      %p77 = scmp.ne.s32.totalorder %s68, %s69
      %p78 = scmp.eq.s32.totalorder %s16, 0
      %p79 = por %p77, %p78
      %p80 = scmp.ne.s32.totalorder %s68, %s69
      %p81 = scmp.eq.s32.totalorder %s17, 1
      %p82 = por %p80, %p81
      %p84 = scmp.ne.s32.totalorder %s69, %s83
      %p85 = scmp.eq.s32.totalorder %s17, 0
      %p86 = por %p84, %p85
      %s88 = sadd.s32 %s87, 1
      %p91 = scmp.eq.s32.totalorder %s11, 1
      %p92 = scmp.ne.s32.totalorder %s87, %s89
      %p93 = scmp.eq.s32.totalorder %s11, 0
      %p94 = por %p92, %p93
      %p95 = scmp.ne.s32.totalorder %s87, %s89
      %p96 = scmp.eq.s32.totalorder %s16, 1
      %p97 = por %p95, %p96
      %p98 = scmp.ne.s32.totalorder %s89, %s90
      %p99 = scmp.eq.s32.totalorder %s16, 0
      %p100 = por %p98, %p99
      %p101 = scmp.ne.s32.totalorder %s89, %s90
      %p102 = scmp.eq.s32.totalorder %s17, 1
      %p103 = por %p101, %p102
      %p105 = scmp.ne.s32.totalorder %s90, %s104
      %p106 = scmp.eq.s32.totalorder %s17, 0
      %p107 = por %p105, %p106
      %s109 = sadd.s32 %s108, 1
      %p112 = scmp.eq.s32.totalorder %s11, 1
      %p113 = scmp.ne.s32.totalorder %s108, %s110
      %p114 = scmp.eq.s32.totalorder %s11, 0
      %p115 = por %p113, %p114
      %p116 = scmp.ne.s32.totalorder %s108, %s110
      %p117 = scmp.eq.s32.totalorder %s16, 1
      %p118 = por %p116, %p117
      %p119 = scmp.ne.s32.totalorder %s110, %s111
      %p120 = scmp.eq.s32.totalorder %s16, 0
      %p121 = por %p119, %p120
      %p122 = scmp.ne.s32.totalorder %s110, %s111
      %p123 = scmp.eq.s32.totalorder %s17, 1
      %p124 = por %p122, %p123
      %p126 = scmp.ne.s32.totalorder %s111, %s125
      %p127 = scmp.eq.s32.totalorder %s17, 0
      %p128 = por %p126, %p127
      %s129 = ssub.s32 %s11, %s18
      %p130 = scmp.eq.s32.totalorder %s129, 0
      %s132 = sadd.s32 %s131, 1
      %s133 = scalar_select %p130, %s131, %s132
      %p136 = pneg %p130
      %p137 = scmp.eq.s32.totalorder %s11, 1
      %p138 = por %p136, %p137
      %p139 = scmp.ne.s32.totalorder %s131, %s134
      %p140 = scmp.eq.s32.totalorder %s11, 0
      %p141 = por %p139, %p140
      %p142 = scmp.ne.s32.totalorder %s131, %s134
      %p143 = scmp.eq.s32.totalorder %s16, 1
      %p144 = por %p142, %p143
      %p145 = scmp.ne.s32.totalorder %s134, %s135
      %p146 = scmp.eq.s32.totalorder %s16, 0
      %p147 = por %p145, %p146
      %p148 = scmp.ne.s32.totalorder %s134, %s135
      %p149 = scmp.eq.s32.totalorder %s17, 1
      %p150 = por %p148, %p149
      %p152 = scmp.ne.s32.totalorder %s135, %s151
      %p153 = scmp.eq.s32.totalorder %s17, 0
      %p154 = por %p152, %p153
      %p155 = scmp.le.s32.totalorder 1, %s11
      %p156 = scmp.lt.s32.totalorder %s11, 3
      %p157 = pnand %p155, %p156
      %p158 = pneg %p157
      // Predicated region
      $region9: #{tpu_custom_call.1} parent=5 // pred_check
        _
      $region10: #{tpu_custom_call.1} parent=5 // pred_check_branch
        %160 = sbr.rel (%p157) target = $region12
      $region11: #{tpu_custom_call.1} parent=5 // pred_region
        %s161 = ssub.s32 %s11, 1
        // Predicated region
        $region13: #{tpu_custom_call.1} parent=11 // pred_check
          %p162 = pneg %p58
        $region14: #{tpu_custom_call.1} parent=11 // pred_check_branch
          %164 = sbr.rel (%p162) target = $region16
        $region15: #{tpu_custom_call.1} parent=11 // pred_region
          _
        $region16: #{tpu_custom_call.1} parent=11 // pred_fallthru
          _
        // Predicated region
        $region17: #{tpu_custom_call.1} parent=11 // pred_check
          %p165 = pneg %p79
        $region18: #{tpu_custom_call.1} parent=11 // pred_check_branch
          %167 = sbr.rel (%p165) target = $region20
        $region19: #{tpu_custom_call.1} parent=11 // pred_region
          _
        $region20: #{tpu_custom_call.1} parent=11 // pred_fallthru
          _
        // Predicated region
        $region21: #{tpu_custom_call.1} parent=11 // pred_check
          %p168 = pneg %p100
        $region22: #{tpu_custom_call.1} parent=11 // pred_check_branch
          %170 = sbr.rel (%p168) target = $region24
        $region23: #{tpu_custom_call.1} parent=11 // pred_region
          _
        $region24: #{tpu_custom_call.1} parent=11 // pred_fallthru
          _
        // Predicated region
        $region25: #{tpu_custom_call.1} parent=11 // pred_check
          %p171 = pneg %p121
        $region26: #{tpu_custom_call.1} parent=11 // pred_check_branch
          %173 = sbr.rel (%p171) target = $region28
        $region27: #{tpu_custom_call.1} parent=11 // pred_region
          _
        $region28: #{tpu_custom_call.1} parent=11 // pred_fallthru
          _
      $region12: #{tpu_custom_call.1} parent=5 // pred_fallthru
        _
      %p174 = scmp.lt.s32.totalorder %s11, 2
      // Predicated region
      $region29: #{tpu_custom_call.1} parent=5 // pred_check
        %p175 = pneg %p174
      $region30: #{tpu_custom_call.1} parent=5 // pred_check_branch
        %177 = sbr.rel (%p175) target = $region32
      $region31: #{tpu_custom_call.1} parent=5 // pred_region
        // Predicated region
        $region33: #{tpu_custom_call.1} parent=31 // pred_check
          %p178 = pneg %p31
        $region34: #{tpu_custom_call.1} parent=31 // pred_check_branch
          %180 = sbr.rel (%p178) target = $region36
        $region35: #{tpu_custom_call.1} parent=31 // pred_region
          %s181 = smul.u32 3, %s11
          %s182 = ssub.s32 5, %s181
          %p183 = scmp.lt.s32.totalorder %s182, 3
          %s184 = scalar_select %p183, %s182, 3
          %s185 = smul.u32 8, %s184
          %s186 = smul.u32 %s185, 2
          %p187 = scmp.lt.s32.totalorder %s181, 4
          %s188 = scalar_select %p187, %s181, 4
          %s189 = smul.addr %s188, 2
          %s190 = smul.addr %s189, 8
          %s191 = scalar_lea.vmem %s0, %s190
          %s192 = smul.u32 3, %s11
          %s193 = ssub.s32 5, %s192
          %p194 = scmp.lt.s32.totalorder %s193, 3
          %s195 = scalar_select %p194, %s193, 3
          %s196 = smul.u32 8, %s195
          %s197 = smul.u32 %s196, 2
        $region36: #{tpu_custom_call.1} parent=31 // pred_fallthru
          _
      $region32: #{tpu_custom_call.1} parent=5 // pred_fallthru
        _
      %p198 = scmp.le.s32.totalorder 1, %s11
      %p199 = scmp.lt.s32.totalorder %s11, 3
      %p200 = pnand %p198, %p199
      %p201 = pneg %p200
      // Predicated region
      $region37: #{tpu_custom_call.1} parent=5 // pred_check
        _
      $region38: #{tpu_custom_call.1} parent=5 // pred_check_branch
        %203 = sbr.rel (%p200) target = $region40
      $region39: #{tpu_custom_call.1} parent=5 // pred_region
        %s204 = ssub.s32 %s11, 1
        %s205 = smul.u32 3, %s16
        %s206 = ssub.s32 5, %s205
        %p207 = scmp.lt.s32.totalorder %s206, 3
        %s208 = scalar_select %p207, %s206, 3
        %s209 = smul.u32 8, %s208
        %s210 = smul.u32 %s209, 2
        %p211 = scmp.lt.s32.totalorder %s205, 4
        %s212 = scalar_select %p211, %s205, 4
        %s213 = smul.addr %s212, 2
        %s214 = smul.addr %s213, 8
        %s215 = scalar_lea.vmem %s0, %s214
        %p216 = pneg %p37
        %p217 = pneg %p34
        %p218 = pneg %p58
        %p219 = pneg %p55
        %p220 = pneg %p79
        %p221 = pneg %p76
        %p222 = pneg %p100
        %p223 = pneg %p97
        %p224 = pneg %p121
        %p225 = pneg %p118
        %p226 = pneg %p147
        %p227 = pneg %p144
        %s228 = sand.u32 %s134, 1
        %s229 = sand.u32 %s134, 1
        %s230 = smul.addr %s229, 24
        %s231 = scalar_lea.vmem [#allocation2], %s230
        %s232 = smul.u32 3, %s16
        %s233 = ssub.s32 5, %s232
        %p234 = scmp.lt.s32.totalorder %s233, 3
        %s235 = scalar_select %p234, %s233, 3
        %s236 = smul.u32 8, %s235
        %s237 = smul.u32 %s236, 2
        %p238 = scmp.lt.s32.totalorder %s232, 4
        %s239 = scalar_select %p238, %s232, 4
        %s240 = smul.addr %s239, 2
        %s241 = smul.addr %s240, 8
        %s242 = scalar_lea.vmem %s0, %s241
        %s243 = smul.u32 3, %s16
        %s244 = ssub.s32 5, %s243
        %p245 = scmp.lt.s32.totalorder %s244, 3
        %s246 = scalar_select %p245, %s244, 3
        %s247 = smul.u32 8, %s246
        %s248 = smul.u32 %s247, 2
        %s249 = smul.u32 3, %s16
        %s250 = ssub.s32 5, %s249
        %p251 = scmp.lt.s32.totalorder %s250, 3
        %s252 = scalar_select %p251, %s250, 3
        %s253 = smul.u32 8, %s252
        %v255 = vld [vmem:[%s242] sm:$0xff]
        %v256 = vld [vmem:[%s242 + $0x8] sm:$0xff]
        %v257 = vld [vmem:[%s242 + $0x10] sm:$0xff]
        %v258 = vld [vmem:[%s242 + $0x18] sm:$0xff]
        %v259 = vld [vmem:[%s242 + $0x20] sm:$0xff]
        %v260 = vld [vmem:[%s242 + $0x28] sm:$0xff]
        %v261 = vpack.c.bf16 %v257, %v255
        %v262 = vpack.c.bf16 %v258, %v256
        %v263 = vpack.c.bf16 %v259, %v259
        %v264 = vpack.c.bf16 %v260, %v260
        %v265 = vld [vmem:[%s1] sm:$0xf]
        %v266 = vld [vmem:[%s1 + $0x4] sm:$0xf]
        %v267 = vld [vmem:[%s1 + $0x8] sm:$0xf]
        %v268 = vld [vmem:[%s1 + $0xc] sm:$0xf]
        %v269 = vld [vmem:[%s1 + $0x10] sm:$0xf]
        %v270 = vld [vmem:[%s1 + $0x14] sm:$0xf]
        %v271 = vld [vmem:[%s1 + $0x18] sm:$0xf]
        %v272 = vld [vmem:[%s1 + $0x1c] sm:$0xf]
        %v273 = vld [vmem:[%s1 + $0x20] sm:$0xf]
        %v274 = vld [vmem:[%s1 + $0x24] sm:$0xf]
        %v275 = vld [vmem:[%s1 + $0x28] sm:$0xf]
        %v276 = vld [vmem:[%s1 + $0x2c] sm:$0xf]
        %v277 = vld [vmem:[%s1 + $0x30] sm:$0xf]
        %v278 = vld [vmem:[%s1 + $0x34] sm:$0xf]
        %v279 = vld [vmem:[%s1 + $0x38] sm:$0xf]
        %v280 = vld [vmem:[%s1 + $0x3c] sm:$0xf]
        %v281 = vld [vmem:[%s1 + $0x40] sm:$0xf]
        %v282 = vld [vmem:[%s1 + $0x44] sm:$0xf]
        %v283 = vld [vmem:[%s1 + $0x48] sm:$0x7]
        %v284 = vld [vmem:[%s2] sm:$0x1]
        %v286 = vperm.slane %v284, 0
        %v307 = vunpack.c.l.b16 %v265
        %v308 = vunpack.c.l.b16 %v266
        %v309 = vunpack.c.l.b16 %v267
        %v310 = vunpack.c.l.b16 %v268
        %v311 = vunpack.c.l.b16 %v269
        %v312 = vunpack.c.l.b16 %v270
        %v313 = vunpack.c.l.b16 %v271
        %v314 = vunpack.c.l.b16 %v272
        %v315 = vunpack.c.l.b16 %v273
        %v316 = vunpack.c.l.b16 %v274
        %v317 = vunpack.c.l.b16 %v275
        %v318 = vunpack.c.l.b16 %v276
        %v319 = vunpack.c.l.b16 %v277
        %v320 = vunpack.c.l.b16 %v278
        %v321 = vunpack.c.l.b16 %v279
        %v322 = vunpack.c.l.b16 %v280
        %v323 = vunpack.c.l.b16 %v281
        %v324 = vunpack.c.l.b16 %v282
        %v325 = vunpack.c.l.b16 %v283
        %v326 = vpack.c.b16 %v308, %v307
        %v327 = vpack.c.b16 %v310, %v309
        %v328 = vpack.c.b16 %v312, %v311
        %v329 = vpack.c.b16 %v314, %v313
        %v330 = vpack.c.b16 %v316, %v315
        %v331 = vpack.c.b16 %v318, %v317
        %v332 = vpack.c.b16 %v320, %v319
        %v333 = vpack.c.b16 %v322, %v321
        %v334 = vpack.c.b16 %v324, %v323
        %v335 = vpack.c.b16 %v325, %v325
        %vm345 = vcmask 179200
        %v347 = vsel %vm345, %v262, 0
        %v350 = vsel %vm345, %v264, 0
        %vm352 = vcmask 1042432
        %v354 = vsel %vm352, %v335, 0
        %356 = vmatpush.bf16.msra.mxu0 %v333
        %357 = vmatpush.bf16.msra.mxu0 %v332
        %358 = vmatpush.bf16.msra.mxu0 %v331
        %359 = vmatpush.bf16.msra.mxu0 %v330
        %360 = vmatpush.bf16.msra.mxu0 %v329
        %361 = vmatpush.bf16.msra.mxu0 %v328
        %362 = vmatpush.bf16.msra.mxu0 %v327
        %363 = vmatpush.bf16.msra.mxu0 %v326
        %364 = vmatmul.bf16.gmra.mxu0 %v261
        %v365 = vpop.f32.mrf.mxu0
        %v366 = vadd.f32 %v286, %v365
        %v367 = vpop.f32.mrf.mxu0
        %v368 = vadd.f32 %v286, %v367
        %369 = vmatmul.bf16.gmra.mxu0 %v263
        %v370 = vpop.f32.mrf.mxu0
        %v371 = vadd.f32 %v286, %v370
        %v372 = vpop.f32.mrf.mxu0
        %373 = vdwg.mxu0
        %374 = vmatpush.bf16.msra.mxu0 0
        %375 = vmatpush.bf16.msra.mxu0 0
        %376 = vmatpush.bf16.msra.mxu0 0
        %377 = vmatpush.bf16.msra.mxu0 0
        %378 = vmatpush.bf16.msra.mxu0 0
        %379 = vmatpush.bf16.msra.mxu0 0
        %380 = vmatpush.bf16.msra.mxu0 %v354
        %381 = vmatpush.bf16.msra.mxu0 %v334
        %382 = vmatmul.bf16.gmra.mxu0 %v347
        %v383 = vpop.f32.mrf.mxu0
        %v384 = vadd.f32 %v366, %v383
        %v385 = vpop.f32.mrf.mxu0
        %v386 = vadd.f32 %v368, %v385
        %387 = vmatmul.bf16.gmra.mxu0 %v350
        %v388 = vpop.f32.mrf.mxu0
        %v389 = vadd.f32 %v371, %v388
        %v390 = vpop.f32.mrf.mxu0
        %391 = vdwg.mxu0
        %v392 = vtanh.pop %v384
        %v393 = vtanh.pop %v386
        %v394 = vtanh.pop %v389
        %v395 = vld [vmem:[%s3] sm:$0xff]
        %v396 = vld [vmem:[%s3 + $0x8] sm:$0xff]
        %v397 = vld [vmem:[%s3 + $0x10] sm:$0xf]
        %v398 = vld [vmem:[%s4] sm:$0x1]
        %v400 = vperm.slane %v398, 0
        %vm402 = vcmask 162816
        %v404 = vsel %vm402, %v392, 0
        %v407 = vsel %vm402, %v393, 0
        %v410 = vsel %vm402, %v394, 0
        %vm412 = vcmask 1043456
        %v414 = vsel %vm412, %v397, 0
        %416 = vmatpush.msra.mxu0 0.0
        %417 = vmatpush.msra.mxu0 0.0
        %418 = vmatpush.msra.mxu0 0.0
        %419 = vmatpush.msra.mxu0 0.0
        %420 = vmatpush.msra.mxu0 0.0
        %421 = vmatpush.msra.mxu0 0.0
        %422 = vmatpush.msra.mxu0 0.0
        %423 = vmatpush.msra.mxu0 0.0
        %424 = vmatpush.msra.mxu0 0.0
        %425 = vmatpush.msra.mxu0 0.0
        %426 = vmatpush.msra.mxu0 0.0
        %427 = vmatpush.msra.mxu0 0.0
        %428 = vmatpush.msra.mxu0 0.0
        %429 = vmatpush.msra.mxu0 %v414
        %430 = vmatpush.msra.mxu0 %v396
        %431 = vmatpush.msra.mxu0 %v395
        %432 = vmatmul.f32.gmra.mxu0 %v404
        %v433 = vpop.f32.mrf.mxu0
        %v434 = vadd.f32 %v400, %v433
        %435 = vmatmul.f32.gmra.mxu0 %v407
        %v436 = vpop.f32.mrf.mxu0
        %v437 = vadd.f32 %v400, %v436
        %438 = vmatmul.f32.gmra.mxu0 %v410
        %v439 = vpop.f32.mrf.mxu0
        %v440 = vadd.f32 %v400, %v439
        %441 = vdwg.mxu0
        %v442 = vlaneseq
        %v443 = vand.u32 %v442, 127
        %vm444 = vcmp.lt.s32.totalorder %v443, 5
        %vm445 = vcmp.ge.s32.totalorder %v443, 5
        %vm446 = vcmp.lt.s32.totalorder %v443, 10
        %vm447 = vmand %vm445, %vm446
        %vm448 = vcmp.ge.s32.totalorder %v443, 10
        %vm449 = vcmp.lt.s32.totalorder %v443, 15
        %vm450 = vmand %vm448, %vm449
        %v451 = vsel %vm444, 1, 0
        %vm452 = vcmp.eq.s32.totalorder %v451, 1
        %v453 = vsel %vm452, %v434, -inf
        %v454 = vsel %vm452, %v437, -inf
        %v455 = vsel %vm452, %v440, -inf
        %vm456 = vcmask 130048
        %v457 = vsel %vm456, %v453, -inf
        %458 = vmax.xlane.f32.xlu0 %v457
        %v459 = vpop.xlane.xlu0 %458
        %v460 = vsel %vm456, %v454, -inf
        %461 = vmax.xlane.f32.xlu0 %v460
        %v462 = vpop.xlane.xlu0 %461
        %v463 = vsel %vm456, %v455, -inf
        %464 = vmax.xlane.f32.xlu0 %v463
        %v465 = vpop.xlane.xlu0 %464
        %v466 = vsub.f32 %v434, %v459
        %v467 = vsub.f32 %v437, %v462
        %v468 = vsub.f32 %v440, %v465
        %v469 = vsel %vm447, 1, 0
        %vm470 = vcmp.eq.s32.totalorder %v469, 1
        %v471 = vsel %vm470, %v434, 0.0
        %v472 = vsel %vm470, %v437, 0.0
        %v473 = vsel %vm470, %v440, 0.0
        %v474 = vsel %vm452, %v466, %v471
        %v475 = vsel %vm452, %v467, %v472
        %v476 = vsel %vm452, %v468, %v473
        %v477 = vmul.f32 %v474, 1.442695
        %v478 = vpow.pop %v477
        %v479 = vmul.f32 %v475, 1.442695
        %v480 = vpow.pop %v479
        %v481 = vmul.f32 %v476, 1.442695
        %v482 = vpow.pop %v481
        %v483 = vsel %vm452, %v478, 0.0
        %v484 = vsel %vm452, %v480, 0.0
        %v485 = vsel %vm452, %v482, 0.0
        %v486 = vsel %vm456, %v483, 0.0
        %487 = vadd.xlane.f32.xlu0 %v486
        %v488 = vpop.xlane.xlu0 %487
        %v489 = vsel %vm456, %v484, 0.0
        %490 = vadd.xlane.f32.xlu0 %v489
        %v491 = vpop.xlane.xlu0 %490
        %v492 = vsel %vm456, %v485, 0.0
        %493 = vadd.xlane.f32.xlu0 %v492
        %v494 = vpop.xlane.xlu0 %493
        %v495 = vrcp.pop %v488
        %v496 = vrcp.pop %v491
        %v497 = vrcp.pop %v494
        %v498 = vmul.f32 %v478, %v495
        %v499 = vmul.f32 %v480, %v496
        %v500 = vmul.f32 %v482, %v497
        %v501 = vsel %vm450, 1, 0
        %vm502 = vcmp.eq.s32.totalorder %v501, 1
        %v503 = vsel %vm502, %v434, 0.0
        %v504 = vsel %vm502, %v437, 0.0
        %v505 = vsel %vm502, %v440, 0.0
        %v506 = vsel %vm470, %v478, %v503
        %v507 = vsel %vm470, %v480, %v504
        %v508 = vsel %vm470, %v482, %v505
        %v509 = vsel %vm452, %v498, %v506
        %v510 = vsel %vm452, %v499, %v507
        %v511 = vsel %vm452, %v500, %v508
        %512 = vst.msk [vmem:[%s231] sm:$0xff] %vm456, %v509
        %513 = vst.msk [vmem:[%s231 + $0x8] sm:$0xff] %vm456, %v510
        %514 = vst.msk [vmem:[%s231 + $0x10] sm:$0xff] %vm456, %v511
        %s515 = sand.u32 %s134, 1
        %s516 = sand.u32 %s134, 1
        %s517 = smul.addr %s516, 24
        %s518 = scalar_lea.vmem [#allocation2], %s517
        // Predicated region
        $region41: #{tpu_custom_call.1} parent=39 // pred_check
          %p519 = pneg %p144
        $region42: #{tpu_custom_call.1} parent=39 // pred_check_branch
          %521 = sbr.rel (%p519) target = $region44
        $region43: #{tpu_custom_call.1} parent=39 // pred_region
          %s522 = smul.u32 3, %s16
          %s523 = ssub.s32 5, %s522
          %p524 = scmp.lt.s32.totalorder %s523, 3
          %s525 = scalar_select %p524, %s523, 3
          %s526 = smul.u32 8, %s525
          %p527 = scmp.ne.s32.totalorder 0, %s526
          %s528 = smul.addr %s522, 8
          %s529 = scalar_lea.vmem %s5, %s528
          // Predicated region
          $region45: #{tpu_custom_call.1} parent=43 // pred_check
            %p530 = pneg %p527
          $region46: #{tpu_custom_call.1} parent=43 // pred_check_branch
            %532 = sbr.rel (%p530) target = $region48
          $region47: #{tpu_custom_call.1} parent=43 // pred_region
            // Predicated region
            $region49: #{tpu_custom_call.1} parent=47 // pred_check
              _
            $region50: #{tpu_custom_call.1} parent=47 // pred_check_branch
              %534 = sbr.rel (0) target = $region52
            $region51: #{tpu_custom_call.1} parent=47 // pred_region
              // Predicated region
              $region71: #{tpu_custom_call.1} parent=51 // pred_check
                _
              $region72: #{tpu_custom_call.1} parent=51 // pred_check_branch
                %589 = sbr.rel (0) target = $region74
              $region73: #{tpu_custom_call.1} parent=51 // pred_region
                %s590 = sdiv.u32.pop %s525, 3
                %s591 = srem.u32.pop %s525, 3
                // While loop
                $region75: #{tpu_custom_call.1} parent=73 // loop_pre_header
                  _
                $region76: #{tpu_custom_call.1} parent=73 // loop_header
                  %s593 = sphi 0, %s595
                  %p594 = scmp.ge.s32.totalorder %s593, %s590
                  %s598 = sphi 0, %s609
                  %s599 = sphi %s518, %s612
                  %s600 = sphi %s529, %s613
                $region77: #{tpu_custom_call.1} parent=73 // loop_header_branch
                  %597 = sbr.rel (%p594) target = $region81
                $region78: #{tpu_custom_call.1} parent=73 // loop_body
                  %v601 = vld [vmem:[%s599] sm:$0xff]
                  %602 = vst [vmem:[%s600] sm:$0xff] %v601
                  %v603 = vld [vmem:[%s599 + $0x8] sm:$0xff]
                  %604 = vst [vmem:[%s600 + $0x8] sm:$0xff] %v603
                  %v605 = vld [vmem:[%s599 + $0x10] sm:$0xff]
                  %606 = vst [vmem:[%s600 + $0x10] sm:$0xff] %v605
                  %s607 = sadd.s32 1, %s598
                  %p608 = scmp.ge.s32.totalorder %s607, %s590
                  %s609 = scalar_select %p608, 0, %s607
                  %s610 = smul.u32 %s609, 24
                  %s611 = smul.u32 %s609, 24
                  %s612 = scalar_lea.vmem %s518, %s610 [#allocation2]
                  %s613 = scalar_lea.vmem %s529, %s611
                $region79: #{tpu_custom_call.1} parent=73 // loop_footer
                  %s595 = sadd.s32 %s593, 1
                $region80: #{tpu_custom_call.1} parent=73 // loop_footer_branch
                  %592 = sbr.rel target = $region76
                $region81: #{tpu_custom_call.1} parent=73 // loop_exit
                  _
                %s614 = sdiv.u32.pop %s525, 3
                %s615 = srem.u32.pop %s525, 3
                %s616 = smul.u32 %s614, 3
                %s617 = smul.u32 8, %s616
                %s618 = scalar_lea.vmem %s518, %s617 [#allocation2]
                %s619 = smul.u32 8, %s616
                %s620 = scalar_lea.vmem %s529, %s619
                // While loop
                $region82: #{tpu_custom_call.1} parent=73 // loop_pre_header
                  _
                $region83: #{tpu_custom_call.1} parent=73 // loop_header
                  %s622 = sphi 0, %s624
                  %p623 = scmp.ge.s32.totalorder %s622, %s615
                  %s627 = sphi 0, %s634
                  %s628 = sphi %s618, %s637
                  %s629 = sphi %s620, %s638
                $region84: #{tpu_custom_call.1} parent=73 // loop_header_branch
                  %626 = sbr.rel (%p623) target = $region88
                $region85: #{tpu_custom_call.1} parent=73 // loop_body
                  %v630 = vld [vmem:[%s628] sm:$0xff]
                  %631 = vst [vmem:[%s629] sm:$0xff] %v630
                  %s632 = sadd.s32 1, %s627
                  %p633 = scmp.ge.s32.totalorder %s632, %s615
                  %s634 = scalar_select %p633, 0, %s632
                  %s635 = smul.u32 %s634, 8
                  %s636 = smul.u32 %s634, 8
                  %s637 = scalar_lea.vmem %s618, %s635 [#allocation2]
                  %s638 = scalar_lea.vmem %s620, %s636
                $region86: #{tpu_custom_call.1} parent=73 // loop_footer
                  %s624 = sadd.s32 %s622, 1
                $region87: #{tpu_custom_call.1} parent=73 // loop_footer_branch
                  %621 = sbr.rel target = $region83
                $region88: #{tpu_custom_call.1} parent=73 // loop_exit
                  _
              $region74: #{tpu_custom_call.1} parent=51 // pred_fallthru
                _
              // Predicated region
              $region89: #{tpu_custom_call.1} parent=51 // pred_check
                _
              $region90: #{tpu_custom_call.1} parent=51 // pred_check_branch
                %640 = sbr.rel target = $region92
              $region91: #{tpu_custom_call.1} parent=51 // pred_region
                _
              $region92: #{tpu_custom_call.1} parent=51 // pred_fallthru
                _
            $region52: #{tpu_custom_call.1} parent=47 // pred_fallthru
              _
            // Predicated region
            $region53: #{tpu_custom_call.1} parent=47 // pred_check
              _
            $region54: #{tpu_custom_call.1} parent=47 // pred_check_branch
              %536 = sbr.rel target = $region56
            $region55: #{tpu_custom_call.1} parent=47 // pred_region
              %s538 = ssub.s32 256, 1
              %s539 = sdiv.u32.pop %s525, 3
              %s540 = srem.u32.pop %s525, 3
              // While loop
              $region57: #{tpu_custom_call.1} parent=55 // loop_pre_header
                _
              $region58: #{tpu_custom_call.1} parent=55 // loop_header
                %s542 = sphi 0, %s544
                %p543 = scmp.ge.s32.totalorder %s542, %s539
                %s547 = sphi 0, %s558
                %s548 = sphi %s518, %s561
                %s549 = sphi %s529, %s562
              $region59: #{tpu_custom_call.1} parent=55 // loop_header_branch
                %546 = sbr.rel (%p543) target = $region63
              $region60: #{tpu_custom_call.1} parent=55 // loop_body
                %v550 = vld [vmem:[%s548] sm:%s538]
                %551 = vst [vmem:[%s549] sm:%s538] %v550
                %v552 = vld [vmem:[%s548 + $0x8] sm:%s538]
                %553 = vst [vmem:[%s549 + $0x8] sm:%s538] %v552
                %v554 = vld [vmem:[%s548 + $0x10] sm:%s538]
                %555 = vst [vmem:[%s549 + $0x10] sm:%s538] %v554
                %s556 = sadd.s32 1, %s547
                %p557 = scmp.ge.s32.totalorder %s556, %s539
                %s558 = scalar_select %p557, 0, %s556
                %s559 = smul.u32 %s558, 24
                %s560 = smul.u32 %s558, 24
                %s561 = scalar_lea.vmem %s518, %s559 [#allocation2]
                %s562 = scalar_lea.vmem %s529, %s560
              $region61: #{tpu_custom_call.1} parent=55 // loop_footer
                %s544 = sadd.s32 %s542, 1
              $region62: #{tpu_custom_call.1} parent=55 // loop_footer_branch
                %541 = sbr.rel target = $region58
              $region63: #{tpu_custom_call.1} parent=55 // loop_exit
                _
              %s563 = sdiv.u32.pop %s525, 3
              %s564 = srem.u32.pop %s525, 3
              %s565 = smul.u32 %s563, 3
              %s566 = smul.u32 8, %s565
              %s567 = scalar_lea.vmem %s518, %s566 [#allocation2]
              %s568 = smul.u32 8, %s565
              %s569 = scalar_lea.vmem %s529, %s568
              // While loop
              $region64: #{tpu_custom_call.1} parent=55 // loop_pre_header
                _
              $region65: #{tpu_custom_call.1} parent=55 // loop_header
                %s571 = sphi 0, %s573
                %p572 = scmp.ge.s32.totalorder %s571, %s564
                %s576 = sphi 0, %s583
                %s577 = sphi %s567, %s586
                %s578 = sphi %s569, %s587
              $region66: #{tpu_custom_call.1} parent=55 // loop_header_branch
                %575 = sbr.rel (%p572) target = $region70
              $region67: #{tpu_custom_call.1} parent=55 // loop_body
                %v579 = vld [vmem:[%s577] sm:%s538]
                %580 = vst [vmem:[%s578] sm:%s538] %v579
                %s581 = sadd.s32 1, %s576
                %p582 = scmp.ge.s32.totalorder %s581, %s564
                %s583 = scalar_select %p582, 0, %s581
                %s584 = smul.u32 %s583, 8
                %s585 = smul.u32 %s583, 8
                %s586 = scalar_lea.vmem %s567, %s584 [#allocation2]
                %s587 = scalar_lea.vmem %s569, %s585
              $region68: #{tpu_custom_call.1} parent=55 // loop_footer
                %s573 = sadd.s32 %s571, 1
              $region69: #{tpu_custom_call.1} parent=55 // loop_footer_branch
                %570 = sbr.rel target = $region65
              $region70: #{tpu_custom_call.1} parent=55 // loop_exit
                _
            $region56: #{tpu_custom_call.1} parent=47 // pred_fallthru
              _
          $region48: #{tpu_custom_call.1} parent=43 // pred_fallthru
            _
          %641 = vnop
        $region44: #{tpu_custom_call.1} parent=39 // pred_fallthru
          _
      $region40: #{tpu_custom_call.1} parent=5 // pred_fallthru
        _
      %p642 = scmp.le.s32.totalorder 2, %s11
      // Predicated region
      $region93: #{tpu_custom_call.1} parent=5 // pred_check
        %p643 = pneg %p642
      $region94: #{tpu_custom_call.1} parent=5 // pred_check_branch
        %645 = sbr.rel (%p643) target = $region96
      $region95: #{tpu_custom_call.1} parent=5 // pred_region
        %s646 = ssub.s32 %s11, 2
        // Predicated region
        $region97: #{tpu_custom_call.1} parent=95 // pred_check
          %p647 = pneg %p150
        $region98: #{tpu_custom_call.1} parent=95 // pred_check_branch
          %649 = sbr.rel (%p647) target = $region100
        $region99: #{tpu_custom_call.1} parent=95 // pred_region
          %s650 = sand.u32 %s135, 1
          %s651 = sand.u32 %s135, 1
          %s652 = smul.addr %s651, 24
          %s653 = scalar_lea.vmem [#allocation2], %s652
        $region100: #{tpu_custom_call.1} parent=95 // pred_fallthru
          _
      $region96: #{tpu_custom_call.1} parent=5 // pred_fallthru
        _
    $region6: #{tpu_custom_call.1} parent=1 // loop_footer
      %s15 = sadd.s32 1, %s11
    $region7: #{tpu_custom_call.1} parent=1 // loop_footer_branch
      %10 = sbr.rel target = $region3
    $region8: #{tpu_custom_call.1} parent=1 // loop_exit
      _

</llo_original>
